<compile_context>
chip_gen: v5e
topology: v5e:2x2
jax: 0.10.0
libtpu: 0.0.40
codegen_flags: <defaults>
</compile_context>

<pallas_src>
import jax
import jax.numpy as jnp
from jax.experimental import pallas as pl
from jax.experimental.pallas import tpu as pltpu

EMB_DIM = 32
HIDDEN = 4 * EMB_DIM   # 128

_SQRT_2_OVER_PI = 0.7978845608028654


def _make_ffn_kernel(sub_p: int, n_sub: int):
    """sub_p: packed rows per inner step; n_sub: inner steps per grid step."""

    def ffn_kernel(xp_ref, w1_ref, b1_ref, w2_ref, b2_ref, op_ref):
        # Weights / biases are resident for the whole grid step; load once (hoisted).
        w1 = w1_ref[...]
        w2 = w2_ref[...]
        b1 = b1_ref[...].astype(jnp.float32)
        b2 = b2_ref[...].astype(jnp.float32)
        c = jnp.float32(_SQRT_2_OVER_PI)

        def body(j, carry):
            r = pl.multiple_of(j * sub_p, sub_p)
            xs = xp_ref[pl.ds(r, sub_p), :]
            # First linear: native-dtype operands on the MXU, f32 accumulation.
            h = jnp.dot(xs, w1, preferred_element_type=jnp.float32) + b1
            # GELU (tanh approximation) in f32; tanh runs on the EUP slot.
            g = 0.5 * h * (1.0 + jnp.tanh(c * (h + 0.044715 * (h * h * h))))
            # Second linear.
            out = jnp.dot(g.astype(w2.dtype), w2,
                          preferred_element_type=jnp.float32) + b2
            op_ref[pl.ds(r, sub_p), :] = out.astype(op_ref.dtype)
            return carry

        jax.lax.fori_loop(0, n_sub, body, 0, unroll=True)

    return ffn_kernel


def _block_diag(w, pack):
    """(E, H) -> (pack*E, pack*H) block-diagonal replication of w."""
    if pack == 1:
        return w
    e, h = w.shape
    eye = jnp.eye(pack, dtype=w.dtype)
    return (eye[:, None, :, None] * w[None, :, None, :]).reshape(pack * e, pack * h)


def feed_forward(x, w1, b1, w2, b2, *, tm=512):
    """x: (batch, seq, emb) -> (batch, seq, emb).  tm = tokens per grid step."""
    B, S, E = x.shape
    H = w1.shape[1]

    if E % 128 == 0:
        pack = 1
    else:
        assert 128 % E == 0, "emb_dim must divide 128 (or be a multiple of 128)"
        pack = 128 // E
    lanes_out = pack * E          # 128 when packed
    lanes_hid = pack * H          # 512 for emb_dim=32

    M = B * S
    x2d = x.reshape(M, E)

    # Tokens per grid step: multiple of 8*pack so packed blocks satisfy the (8,128)
    # tiling constraint; pad the token dim (padded rows are sliced off afterwards).
    row_align = 8 * pack
    tm_req = max(row_align, (tm // row_align) * row_align)
    m_aligned = pl.cdiv(M, row_align) * row_align
    tm_eff = min(tm_req, m_aligned)
    m_pad = pl.cdiv(m_aligned, tm_eff) * tm_eff
    if m_pad != M:
        x2d = jnp.pad(x2d, ((0, m_pad - M), (0, 0)))

    # Lane-dense packed views (pure reshapes of row-major data) + packed weights.
    xp = x2d.reshape(m_pad // pack, lanes_out)
    w1p = _block_diag(w1, pack)                         # (pack*E, pack*H)
    w2p = _block_diag(w2, pack)                         # (pack*H, pack*E)
    b1p = jnp.tile(b1.reshape(-1), pack).reshape(1, lanes_hid)
    b2p = jnp.tile(b2.reshape(-1), pack).reshape(1, lanes_out)

    grid = m_pad // tm_eff
    blk_p = tm_eff // pack                              # packed rows per grid step

    # Inner sub-tile keeps f32 h/g slabs at <=64 KiB each (no vreg spill at tm=512).
    sub_tokens = 128 if tm_eff % 128 == 0 else tm_eff
    sub_p = sub_tokens // pack
    n_sub = tm_eff // sub_tokens

    kernel = _make_ffn_kernel(sub_p, n_sub)

    out_packed = pl.pallas_call(
        kernel,
        out_shape=jax.ShapeDtypeStruct((m_pad // pack, lanes_out), x.dtype),
        grid_spec=pltpu.PrefetchScalarGridSpec(
            num_scalar_prefetch=0,
            grid=(grid,),
            in_specs=[
                pl.BlockSpec((blk_p, lanes_out), lambda i: (i, 0)),     # packed x
                pl.BlockSpec((pack * E, lanes_hid), lambda i: (0, 0)),  # W1 (resident)
                pl.BlockSpec((1, lanes_hid), lambda i: (0, 0)),         # b1 (resident)
                pl.BlockSpec((pack * H, lanes_out), lambda i: (0, 0)),  # W2 (resident)
                pl.BlockSpec((1, lanes_out), lambda i: (0, 0)),         # b2 (resident)
            ],
            out_specs=pl.BlockSpec((blk_p, lanes_out), lambda i: (i, 0)),
        ),
        compiler_params=pltpu.CompilerParams(
            dimension_semantics=("parallel",)),
    )(xp, w1p, b1p, w2p, b2p)

    out2d = out_packed.reshape(m_pad, E)[:M]
    return out2d.reshape(B, S, E)


def init_params(key, emb_dim, hidden):
    k1, k2, k3, k4 = jax.random.split(key, 4)
    # Deterministic init roughly like PyTorch Linear (uniform +/- 1/sqrt(fan_in)).
    lim1 = 1.0 / jnp.sqrt(emb_dim)
    lim2 = 1.0 / jnp.sqrt(hidden)
    w1 = jax.random.uniform(k1, (emb_dim, hidden), jnp.float32, -lim1, lim1)
    b1 = jax.random.uniform(k2, (hidden,), jnp.float32, -lim1, lim1)
    w2 = jax.random.uniform(k3, (hidden, emb_dim), jnp.float32, -lim2, lim2)
    b2 = jax.random.uniform(k4, (emb_dim,), jnp.float32, -lim2, lim2)
    return w1, b1, w2, b2


def _ref_feed_forward(x, w1, b1, w2, b2):
    hi = jax.lax.Precision.HIGHEST
    h = jnp.einsum("bse,eh->bsh", x, w1, precision=hi) + b1
    c = jnp.sqrt(2.0 / jnp.pi)
    g = 0.5 * h * (1.0 + jnp.tanh(c * (h + 0.044715 * h ** 3)))
    return jnp.einsum("bsh,he->bse", g, w2, precision=hi) + b2


if __name__ == "__main__":
    key = jax.random.PRNGKey(0)
    kx, kp, kx2 = jax.random.split(key, 3)

    w1, b1, w2, b2 = init_params(kp, EMB_DIM, HIDDEN)

    # Small shape consistent with the module (batch=2, seq=8, emb=32).
    B, S = 2, 8
    x = jax.random.normal(kx, (B, S, EMB_DIM), jnp.float32)
    out = jax.block_until_ready(feed_forward(x, w1, b1, w2, b2))
    ref = _ref_feed_forward(x, w1, b1, w2, b2)
    assert out.shape == (B, S, EMB_DIM)
    assert jnp.allclose(out, ref, atol=1e-4, rtol=1e-4), \
        float(jnp.max(jnp.abs(out - ref)))

    # Larger ragged shape: exercises the multi-step grid (tm=512 tokens/step),
    # token-dim padding, and the inner unrolled sub-tile loop.
    B2, S2 = 3, 300
    x2 = jax.random.normal(kx2, (B2, S2, EMB_DIM), jnp.float32)
    out2 = jax.block_until_ready(feed_forward(x2, w1, b1, w2, b2))
    ref2 = _ref_feed_forward(x2, w1, b1, w2, b2)
    assert out2.shape == (B2, S2, EMB_DIM)
    assert jnp.allclose(out2, ref2, atol=1e-4, rtol=1e-4), \
        float(jnp.max(jnp.abs(out2 - ref2)))

    print("KERNEL_OK")
</pallas_src>

<mosaic_0001>
module attributes {stable_mosaic.version = 11 : i64} {
  func.func @ffn_kernel(%arg0: i32, %arg1: memref<8x128xf32, #tpu.memory_space<vmem>>, %arg2: memref<128x512xf32, #tpu.memory_space<vmem>>, %arg3: memref<1x512xf32, #tpu.memory_space<vmem>>, %arg4: memref<512x128xf32, #tpu.memory_space<vmem>>, %arg5: memref<1x128xf32, #tpu.memory_space<vmem>>, %arg6: memref<8x128xf32, #tpu.memory_space<vmem>>) attributes {dimension_semantics = [#tpu.dimension_semantics<parallel>], iteration_bounds = array<i64: 1>, scalar_prefetch = 0 : i64, scratch_operands = 0 : i64, tpu.core_type = #tpu.core_type<tc>, window_params = [{transform_indices = @transform_0, window_bounds = array<i64: 8, 128>}, {pipeline_mode = #tpu.pipeline_mode<synchronous>, transform_indices = @transform_1, window_bounds = array<i64: 128, 512>}, {pipeline_mode = #tpu.pipeline_mode<synchronous>, transform_indices = @transform_2, window_bounds = array<i64: 1, 512>}, {pipeline_mode = #tpu.pipeline_mode<synchronous>, transform_indices = @transform_3, window_bounds = array<i64: 512, 128>}, {pipeline_mode = #tpu.pipeline_mode<synchronous>, transform_indices = @transform_4, window_bounds = array<i64: 1, 128>}, {transform_indices = @transform_5, window_bounds = array<i64: 8, 128>}]} {
    %c0 = arith.constant 0 : index
    %c0_0 = arith.constant 0 : index
    %0 = vector.load %arg2[%c0, %c0_0] : memref<128x512xf32, #tpu.memory_space<vmem>>, vector<128x512xf32>
    %c0_1 = arith.constant 0 : index
    %c0_2 = arith.constant 0 : index
    %1 = vector.load %arg4[%c0_1, %c0_2] : memref<512x128xf32, #tpu.memory_space<vmem>>, vector<512x128xf32>
    %c0_3 = arith.constant 0 : index
    %c0_4 = arith.constant 0 : index
    %2 = vector.load %arg3[%c0_3, %c0_4] : memref<1x512xf32, #tpu.memory_space<vmem>>, vector<1x512xf32>
    %c0_5 = arith.constant 0 : index
    %c0_6 = arith.constant 0 : index
    %3 = vector.load %arg5[%c0_5, %c0_6] : memref<1x128xf32, #tpu.memory_space<vmem>>, vector<1x128xf32>
    %cst = arith.constant 0.797884583 : f32
    %c0_i32 = arith.constant 0 : i32
    %c8_i32 = arith.constant 8 : i32
    %4 = arith.muli %c0_i32, %c8_i32 : i32
    %5 = tpu.assume_multiple %4, 8 : i32
    %6 = arith.index_cast %5 : i32 to index
    %c0_7 = arith.constant 0 : index
    %7 = vector.load %arg1[%6, %c0_7] : memref<8x128xf32, #tpu.memory_space<vmem>>, vector<8x128xf32>
    %cst_8 = arith.constant dense<0.000000e+00> : vector<8x512xf32>
    %8 = tpu.matmul %7, %0, %cst_8 {dimension_numbers = #tpu.dot_dimension_numbers<[1], [0], [0], [1], [0, 0, 1, 1], [], []>} : vector<8x128xf32>, vector<128x512xf32>, vector<8x512xf32> -> vector<8x512xf32>
    %9 = vector.broadcast %2 : vector<1x512xf32> to vector<8x512xf32>
    %10 = arith.addf %8, %9 : vector<8x512xf32>
    %cst_9 = arith.constant 5.000000e-01 : f32
    %11 = vector.broadcast %cst_9 : f32 to vector<8x512xf32>
    %12 = arith.mulf %11, %10 : vector<8x512xf32>
    %13 = arith.mulf %10, %10 : vector<8x512xf32>
    %14 = arith.mulf %13, %10 : vector<8x512xf32>
    %cst_10 = arith.constant 4.471500e-02 : f32
    %15 = vector.broadcast %cst_10 : f32 to vector<8x512xf32>
    %16 = arith.mulf %15, %14 : vector<8x512xf32>
    %17 = arith.addf %10, %16 : vector<8x512xf32>
    %18 = vector.broadcast %cst : f32 to vector<8x512xf32>
    %19 = arith.mulf %18, %17 : vector<8x512xf32>
    %20 = math.tanh %19 : vector<8x512xf32>
    %cst_11 = arith.constant 1.000000e+00 : f32
    %21 = vector.broadcast %cst_11 : f32 to vector<8x512xf32>
    %22 = arith.addf %21, %20 : vector<8x512xf32>
    %23 = arith.mulf %12, %22 : vector<8x512xf32>
    %cst_12 = arith.constant dense<0.000000e+00> : vector<8x128xf32>
    %24 = tpu.matmul %23, %1, %cst_12 {dimension_numbers = #tpu.dot_dimension_numbers<[1], [0], [0], [1], [0, 0, 1, 1], [], []>} : vector<8x512xf32>, vector<512x128xf32>, vector<8x128xf32> -> vector<8x128xf32>
    %25 = vector.broadcast %3 : vector<1x128xf32> to vector<8x128xf32>
    %26 = arith.addf %24, %25 : vector<8x128xf32>
    %27 = arith.index_cast %5 : i32 to index
    %c0_13 = arith.constant 0 : index
    %28 = vector.load %arg6[%27, %c0_13] : memref<8x128xf32, #tpu.memory_space<vmem>>, vector<8x128xf32>
    tpu.vector_store %arg6[%27, %c0_13], %26 {strides = array<i32>} : memref<8x128xf32, #tpu.memory_space<vmem>>, vector<8x128xf32>,
    %c1_i32 = arith.constant 1 : i32
    return
  }
  func.func @transform_0(%arg0: i32) -> (i32, i32) {
    %c0_i32 = arith.constant 0 : i32
    %c0_i32_0 = arith.constant 0 : i32
    return %arg0, %c0_i32 : i32, i32
  }
  func.func @transform_1(%arg0: i32) -> (i32, i32) {
    %c0_i32 = arith.constant 0 : i32
    %c0_i32_0 = arith.constant 0 : i32
    %c0_i32_1 = arith.constant 0 : i32
    return %c0_i32, %c0_i32_0 : i32, i32
  }
  func.func @transform_2(%arg0: i32) -> (i32, i32) {
    %c0_i32 = arith.constant 0 : i32
    %c0_i32_0 = arith.constant 0 : i32
    %c0_i32_1 = arith.constant 0 : i32
    return %c0_i32, %c0_i32_0 : i32, i32
  }
  func.func @transform_3(%arg0: i32) -> (i32, i32) {
    %c0_i32 = arith.constant 0 : i32
    %c0_i32_0 = arith.constant 0 : i32
    %c0_i32_1 = arith.constant 0 : i32
    return %c0_i32, %c0_i32_0 : i32, i32
  }
  func.func @transform_4(%arg0: i32) -> (i32, i32) {
    %c0_i32 = arith.constant 0 : i32
    %c0_i32_0 = arith.constant 0 : i32
    %c0_i32_1 = arith.constant 0 : i32
    return %c0_i32, %c0_i32_0 : i32, i32
  }
  func.func @transform_5(%arg0: i32) -> (i32, i32) {
    %c0_i32 = arith.constant 0 : i32
    %c0_i32_0 = arith.constant 0 : i32
    return %arg0, %c0_i32 : i32, i32
  }
}

</mosaic_0001>

<llo_original>
// kernel: tpu_custom_call.1
$region0: #{tpu_custom_call.1}
  #allocation0 [shape = 'u32[]', space=smem, size = 0x4, offset = 0x4, fixed_abs, tag = 'smem constant byte address 0x4 - core index']
  #allocation1 [shape = 'u32[72,128]{1,0:T(1,128)}', space=vmem, size = 0x9000, scoped, tag = 'internal scratch']
  %s0 = inlined_call_operand.hbm [shape: f32[8,128], index: 0, kind: input, shape index: {}]
  %s1 = inlined_call_operand.hbm [shape: f32[128,512], index: 1, kind: input, shape index: {}]
  %s2 = inlined_call_operand.hbm [shape: f32[1,512], index: 2, kind: input, shape index: {}]
  %s3 = inlined_call_operand.hbm [shape: f32[512,128], index: 3, kind: input, shape index: {}]
  %s4 = inlined_call_operand.vmem [shape: f32[1,128], index: 4, kind: input, shape index: {}]
  %s5 = inlined_call_operand.hbm [shape: f32[8,128], index: 5, kind: output, shape index: {}]
  %s6 = sld [smem:[#allocation0]]
  $region46: #{tpu_custom_call.1} parent=0
    _
  %s8 = ssub.s32 1, %s6
  %s9 = scalar_select 0, %s8, %s6
  $region1: #{tpu_custom_call.1} parent=0
    #allocation2 [shape = 'u8[4096]{0}', space=vmem, size = 0x1000, scoped, tag = 'input window, operand 0, single buffered']
    #allocation3 [shape = 's32[1]{0}', space=sflag, size = 0x4, scoped, tag = 'scoped memory for tpu_custom_call.1']
    #allocation4 [shape = 's32[1]{0}', space=sflag, size = 0x4, scoped, tag = 'scoped memory for tpu_custom_call.1']
    #allocation5 [shape = 'u8[262144]{0}', space=vmem, size = 0x40000, scoped, tag = 'input window, operand 1, single buffered']
    #allocation6 [shape = 's32[1]{0}', space=sflag, size = 0x4, scoped, tag = 'scoped memory for tpu_custom_call.1']
    #allocation7 [shape = 'u8[2048]{0}', space=vmem, size = 0x800, scoped, tag = 'input window, operand 2, single buffered']
    #allocation8 [shape = 'u8[262144]{0}', space=vmem, size = 0x40000, scoped, tag = 'input window, operand 3, single buffered']
    #allocation9 [shape = 's32[1]{0}', space=sflag, size = 0x4, scoped, tag = 'scoped memory for tpu_custom_call.1']
    #allocation10 [shape = 'u8[4096]{0}', space=vmem, size = 0x1000, scoped, tag = 'output window, operand 0, single buffered']
    %10 = vsyncpa [#allocation3], 0
    %11 = vsyncpa [#allocation6], 0
    %12 = vsyncpa [#allocation9], 0
    %13 = vsyncpa [#allocation4], 0
    // Predicated region
    $region2: #{tpu_custom_call.1} parent=1 // pred_check
      _
    $region3: #{tpu_custom_call.1} parent=1 // pred_check_branch
      %15 = sbr.rel (0) target = $region5
    $region4: #{tpu_custom_call.1} parent=1 // pred_region
      %17 = vsyncadd [#allocation3], 0
      %s19 = sshll.u32 %s0, 4
      %s20 = int_to_ptr.hbm [resolvable:$true] %s19
      %s21 = sshll.u32 [#allocation2], 4
      %s22 = int_to_ptr.vmem [resolvable:$true] %s21
      %24 = dma.hbm_to_vmem [thread:$0]  %s20, 128, %s22, [#allocation3]
    $region5: #{tpu_custom_call.1} parent=1 // pred_fallthru
      _
    // Predicated region
    $region6: #{tpu_custom_call.1} parent=1 // pred_check
      _
    $region7: #{tpu_custom_call.1} parent=1 // pred_check_branch
      %26 = sbr.rel (0) target = $region9
    $region8: #{tpu_custom_call.1} parent=1 // pred_region
      %28 = vsyncadd [#allocation6], 0
      %s29 = sshll.u32 %s1, 4
      %s30 = int_to_ptr.hbm [resolvable:$true] %s29
      %s31 = sshll.u32 [#allocation5], 4
      %s32 = int_to_ptr.vmem [resolvable:$true] %s31
      %37 = dma.hbm_to_vmem [thread:$0]  %s30, 8192, %s32, [#allocation6], 512, 512, 32
    $region9: #{tpu_custom_call.1} parent=1 // pred_fallthru
      _
    // Predicated region
    $region10: #{tpu_custom_call.1} parent=1 // pred_check
      _
    $region11: #{tpu_custom_call.1} parent=1 // pred_check_branch
      %39 = sbr.rel (0) target = $region13
    $region12: #{tpu_custom_call.1} parent=1 // pred_region
      %41 = vsyncadd [#allocation6], 0
      %s43 = sshll.u32 %s2, 4
      %s44 = int_to_ptr.hbm [resolvable:$true] %s43
      %s45 = sshll.u32 [#allocation7], 4
      %s46 = int_to_ptr.vmem [resolvable:$true] %s45
      %48 = dma.hbm_to_vmem [thread:$0]  %s44, 64, %s46, [#allocation6]
    $region13: #{tpu_custom_call.1} parent=1 // pred_fallthru
      _
    // Predicated region
    $region14: #{tpu_custom_call.1} parent=1 // pred_check
      _
    $region15: #{tpu_custom_call.1} parent=1 // pred_check_branch
      %50 = sbr.rel (0) target = $region17
    $region16: #{tpu_custom_call.1} parent=1 // pred_region
      %52 = vsyncadd [#allocation9], 0
      %s53 = sshll.u32 %s3, 4
      %s54 = int_to_ptr.hbm [resolvable:$true] %s53
      %s55 = sshll.u32 [#allocation8], 4
      %s56 = int_to_ptr.vmem [resolvable:$true] %s55
      %61 = dma.hbm_to_vmem [thread:$0]  %s54, 8192, %s56, [#allocation9], 128, 128, 8
    $region17: #{tpu_custom_call.1} parent=1 // pred_fallthru
      _
    // Predicated region
    $region18: #{tpu_custom_call.1} parent=1 // pred_check
      _
    $region19: #{tpu_custom_call.1} parent=1 // pred_check_branch
      %63 = sbr.rel (0) target = $region21
    $region20: #{tpu_custom_call.1} parent=1 // pred_region
      _
    $region21: #{tpu_custom_call.1} parent=1 // pred_fallthru
      _
    // Predicated region
    $region22: #{tpu_custom_call.1} parent=1 // pred_check
      _
    $region23: #{tpu_custom_call.1} parent=1 // pred_check_branch
      %65 = sbr.rel (0) target = $region25
    $region24: #{tpu_custom_call.1} parent=1 // pred_region
      %67 = dma.done [#allocation3], 128
    $region25: #{tpu_custom_call.1} parent=1 // pred_fallthru
      _
    // Predicated region
    $region26: #{tpu_custom_call.1} parent=1 // pred_check
      _
    $region27: #{tpu_custom_call.1} parent=1 // pred_check_branch
      %69 = sbr.rel (0) target = $region29
    $region28: #{tpu_custom_call.1} parent=1 // pred_region
      %71 = dma.done [#allocation6], 8192
    $region29: #{tpu_custom_call.1} parent=1 // pred_fallthru
      _
    // Predicated region
    $region30: #{tpu_custom_call.1} parent=1 // pred_check
      _
    $region31: #{tpu_custom_call.1} parent=1 // pred_check_branch
      %73 = sbr.rel (0) target = $region33
    $region32: #{tpu_custom_call.1} parent=1 // pred_region
      %75 = dma.done [#allocation6], 64
    $region33: #{tpu_custom_call.1} parent=1 // pred_fallthru
      _
    // Predicated region
    $region34: #{tpu_custom_call.1} parent=1 // pred_check
      _
    $region35: #{tpu_custom_call.1} parent=1 // pred_check_branch
      %77 = sbr.rel (0) target = $region37
    $region36: #{tpu_custom_call.1} parent=1 // pred_region
      %79 = dma.done [#allocation9], 8192
    $region37: #{tpu_custom_call.1} parent=1 // pred_fallthru
      _
    %v80 = vld [vmem:[#allocation5] sm:$0xff]
    %v81 = vld [vmem:[#allocation5 + $0x8] sm:$0xff]
    %v82 = vld [vmem:[#allocation5 + $0x10] sm:$0xff]
    %v83 = vld [vmem:[#allocation5 + $0x18] sm:$0xff]
    %v84 = vld [vmem:[#allocation5 + $0x20] sm:$0xff]
    %v85 = vld [vmem:[#allocation5 + $0x28] sm:$0xff]
    %v86 = vld [vmem:[#allocation5 + $0x30] sm:$0xff]
    %v87 = vld [vmem:[#allocation5 + $0x38] sm:$0xff]
    %v88 = vld [vmem:[#allocation5 + $0x40] sm:$0xff]
    %v89 = vld [vmem:[#allocation5 + $0x48] sm:$0xff]
    %v90 = vld [vmem:[#allocation5 + $0x50] sm:$0xff]
    %v91 = vld [vmem:[#allocation5 + $0x58] sm:$0xff]
    %v92 = vld [vmem:[#allocation5 + $0x60] sm:$0xff]
    %v93 = vld [vmem:[#allocation5 + $0x68] sm:$0xff]
    %v94 = vld [vmem:[#allocation5 + $0x70] sm:$0xff]
    %v95 = vld [vmem:[#allocation5 + $0x78] sm:$0xff]
    %v96 = vld [vmem:[#allocation5 + $0x80] sm:$0xff]
    %v97 = vld [vmem:[#allocation5 + $0x88] sm:$0xff]
    %v98 = vld [vmem:[#allocation5 + $0x90] sm:$0xff]
    %v99 = vld [vmem:[#allocation5 + $0x98] sm:$0xff]
    %v100 = vld [vmem:[#allocation5 + $0xa0] sm:$0xff]
    %v101 = vld [vmem:[#allocation5 + $0xa8] sm:$0xff]
    %v102 = vld [vmem:[#allocation5 + $0xb0] sm:$0xff]
    %v103 = vld [vmem:[#allocation5 + $0xb8] sm:$0xff]
    %v104 = vld [vmem:[#allocation5 + $0xc0] sm:$0xff]
    %v105 = vld [vmem:[#allocation5 + $0xc8] sm:$0xff]
    %v106 = vld [vmem:[#allocation5 + $0xd0] sm:$0xff]
    %v107 = vld [vmem:[#allocation5 + $0xd8] sm:$0xff]
    %v108 = vld [vmem:[#allocation5 + $0xe0] sm:$0xff]
    %v109 = vld [vmem:[#allocation5 + $0xe8] sm:$0xff]
    %v110 = vld [vmem:[#allocation5 + $0xf0] sm:$0xff]
    %v111 = vld [vmem:[#allocation5 + $0xf8] sm:$0xff]
    %v112 = vld [vmem:[#allocation5 + $0x100] sm:$0xff]
    %v113 = vld [vmem:[#allocation5 + $0x108] sm:$0xff]
    %v114 = vld [vmem:[#allocation5 + $0x110] sm:$0xff]
    %v115 = vld [vmem:[#allocation5 + $0x118] sm:$0xff]
    %v116 = vld [vmem:[#allocation5 + $0x120] sm:$0xff]
    %v117 = vld [vmem:[#allocation5 + $0x128] sm:$0xff]
    %v118 = vld [vmem:[#allocation5 + $0x130] sm:$0xff]
    %v119 = vld [vmem:[#allocation5 + $0x138] sm:$0xff]
    %v120 = vld [vmem:[#allocation5 + $0x140] sm:$0xff]
    %v121 = vld [vmem:[#allocation5 + $0x148] sm:$0xff]
    %v122 = vld [vmem:[#allocation5 + $0x150] sm:$0xff]
    %v123 = vld [vmem:[#allocation5 + $0x158] sm:$0xff]
    %v124 = vld [vmem:[#allocation5 + $0x160] sm:$0xff]
    %v125 = vld [vmem:[#allocation5 + $0x168] sm:$0xff]
    %v126 = vld [vmem:[#allocation5 + $0x170] sm:$0xff]
    %v127 = vld [vmem:[#allocation5 + $0x178] sm:$0xff]
    %v128 = vld [vmem:[#allocation5 + $0x180] sm:$0xff]
    %v129 = vld [vmem:[#allocation5 + $0x188] sm:$0xff]
    %v130 = vld [vmem:[#allocation5 + $0x190] sm:$0xff]
    %v131 = vld [vmem:[#allocation5 + $0x198] sm:$0xff]
    %v132 = vld [vmem:[#allocation5 + $0x1a0] sm:$0xff]
    %v133 = vld [vmem:[#allocation5 + $0x1a8] sm:$0xff]
    %v134 = vld [vmem:[#allocation5 + $0x1b0] sm:$0xff]
    %v135 = vld [vmem:[#allocation5 + $0x1b8] sm:$0xff]
    %v136 = vld [vmem:[#allocation5 + $0x1c0] sm:$0xff]
    %v137 = vld [vmem:[#allocation5 + $0x1c8] sm:$0xff]
    %v138 = vld [vmem:[#allocation5 + $0x1d0] sm:$0xff]
    %v139 = vld [vmem:[#allocation5 + $0x1d8] sm:$0xff]
    %v140 = vld [vmem:[#allocation5 + $0x1e0] sm:$0xff]
    %v141 = vld [vmem:[#allocation5 + $0x1e8] sm:$0xff]
    %v142 = vld [vmem:[#allocation5 + $0x1f0] sm:$0xff]
    %v143 = vld [vmem:[#allocation5 + $0x1f8] sm:$0xff]
    %v144 = vld [vmem:[#allocation8] sm:$0xff]
    %v145 = vld [vmem:[#allocation8 + $0x8] sm:$0xff]
    %v146 = vld [vmem:[#allocation8 + $0x10] sm:$0xff]
    %v147 = vld [vmem:[#allocation8 + $0x18] sm:$0xff]
    %v148 = vld [vmem:[#allocation8 + $0x20] sm:$0xff]
    %v149 = vld [vmem:[#allocation8 + $0x28] sm:$0xff]
    %v150 = vld [vmem:[#allocation8 + $0x30] sm:$0xff]
    %v151 = vld [vmem:[#allocation8 + $0x38] sm:$0xff]
    %v152 = vld [vmem:[#allocation8 + $0x40] sm:$0xff]
    %v153 = vld [vmem:[#allocation8 + $0x48] sm:$0xff]
    %v154 = vld [vmem:[#allocation8 + $0x50] sm:$0xff]
    %v155 = vld [vmem:[#allocation8 + $0x58] sm:$0xff]
    %v156 = vld [vmem:[#allocation8 + $0x60] sm:$0xff]
    %v157 = vld [vmem:[#allocation8 + $0x68] sm:$0xff]
    %v158 = vld [vmem:[#allocation8 + $0x70] sm:$0xff]
    %v159 = vld [vmem:[#allocation8 + $0x78] sm:$0xff]
    %v160 = vld [vmem:[#allocation8 + $0x80] sm:$0xff]
    %v161 = vld [vmem:[#allocation8 + $0x88] sm:$0xff]
    %v162 = vld [vmem:[#allocation8 + $0x90] sm:$0xff]
    %v163 = vld [vmem:[#allocation8 + $0x98] sm:$0xff]
    %v164 = vld [vmem:[#allocation8 + $0xa0] sm:$0xff]
    %v165 = vld [vmem:[#allocation8 + $0xa8] sm:$0xff]
    %v166 = vld [vmem:[#allocation8 + $0xb0] sm:$0xff]
    %v167 = vld [vmem:[#allocation8 + $0xb8] sm:$0xff]
    %v168 = vld [vmem:[#allocation8 + $0xc0] sm:$0xff]
    %v169 = vld [vmem:[#allocation8 + $0xc8] sm:$0xff]
    %v170 = vld [vmem:[#allocation8 + $0xd0] sm:$0xff]
    %v171 = vld [vmem:[#allocation8 + $0xd8] sm:$0xff]
    %v172 = vld [vmem:[#allocation8 + $0xe0] sm:$0xff]
    %v173 = vld [vmem:[#allocation8 + $0xe8] sm:$0xff]
    %v174 = vld [vmem:[#allocation8 + $0xf0] sm:$0xff]
    %v175 = vld [vmem:[#allocation8 + $0xf8] sm:$0xff]
    %v176 = vld [vmem:[#allocation8 + $0x100] sm:$0xff]
    %v177 = vld [vmem:[#allocation8 + $0x108] sm:$0xff]
    %v178 = vld [vmem:[#allocation8 + $0x110] sm:$0xff]
    %v179 = vld [vmem:[#allocation8 + $0x118] sm:$0xff]
    %v180 = vld [vmem:[#allocation8 + $0x120] sm:$0xff]
    %v181 = vld [vmem:[#allocation8 + $0x128] sm:$0xff]
    %v182 = vld [vmem:[#allocation8 + $0x130] sm:$0xff]
    %v183 = vld [vmem:[#allocation8 + $0x138] sm:$0xff]
    %v184 = vld [vmem:[#allocation8 + $0x140] sm:$0xff]
    %v185 = vld [vmem:[#allocation8 + $0x148] sm:$0xff]
    %v186 = vld [vmem:[#allocation8 + $0x150] sm:$0xff]
    %v187 = vld [vmem:[#allocation8 + $0x158] sm:$0xff]
    %v188 = vld [vmem:[#allocation8 + $0x160] sm:$0xff]
    %v189 = vld [vmem:[#allocation8 + $0x168] sm:$0xff]
    %v190 = vld [vmem:[#allocation8 + $0x170] sm:$0xff]
    %v191 = vld [vmem:[#allocation8 + $0x178] sm:$0xff]
    %v192 = vld [vmem:[#allocation8 + $0x180] sm:$0xff]
    %v193 = vld [vmem:[#allocation8 + $0x188] sm:$0xff]
    %v194 = vld [vmem:[#allocation8 + $0x190] sm:$0xff]
    %v195 = vld [vmem:[#allocation8 + $0x198] sm:$0xff]
    %v196 = vld [vmem:[#allocation8 + $0x1a0] sm:$0xff]
    %v197 = vld [vmem:[#allocation8 + $0x1a8] sm:$0xff]
    %v198 = vld [vmem:[#allocation8 + $0x1b0] sm:$0xff]
    %v199 = vld [vmem:[#allocation8 + $0x1b8] sm:$0xff]
    %v200 = vld [vmem:[#allocation8 + $0x1c0] sm:$0xff]
    %v201 = vld [vmem:[#allocation8 + $0x1c8] sm:$0xff]
    %v202 = vld [vmem:[#allocation8 + $0x1d0] sm:$0xff]
    %v203 = vld [vmem:[#allocation8 + $0x1d8] sm:$0xff]
    %v204 = vld [vmem:[#allocation8 + $0x1e0] sm:$0xff]
    %v205 = vld [vmem:[#allocation8 + $0x1e8] sm:$0xff]
    %v206 = vld [vmem:[#allocation8 + $0x1f0] sm:$0xff]
    %v207 = vld [vmem:[#allocation8 + $0x1f8] sm:$0xff]
    %v208 = vld [vmem:[#allocation7] sm:$0xf]
    %v209 = vld [vmem:[%s4] sm:$0x1]
    %v210 = vld [vmem:[#allocation2] sm:$0xff]
    %v212 = vperm.slane %v208, 0
    %v213 = vperm.slane %v208, 1
    %v214 = vperm.slane %v208, 2
    %v215 = vperm.slane %v208, 3
    %220 = vmatpush.msra.mxu0 %v140
    %221 = vmatpush.msra.mxu0 %v136
    %222 = vmatpush.msra.mxu0 %v132
    %223 = vmatpush.msra.mxu0 %v128
    %224 = vmatpush.msra.mxu0 %v124
    %225 = vmatpush.msra.mxu0 %v120
    %226 = vmatpush.msra.mxu0 %v116
    %227 = vmatpush.msra.mxu0 %v112
    %228 = vmatpush.msra.mxu0 %v108
    %229 = vmatpush.msra.mxu0 %v104
    %230 = vmatpush.msra.mxu0 %v100
    %231 = vmatpush.msra.mxu0 %v96
    %232 = vmatpush.msra.mxu0 %v92
    %233 = vmatpush.msra.mxu0 %v88
    %234 = vmatpush.msra.mxu0 %v84
    %235 = vmatpush.msra.mxu0 %v80
    %236 = vmatmul.f32.gmra.mxu0 %v210
    %v237 = vpop.f32.mrf.mxu0
    %v238 = vadd.f32 %v212, %v237
    %239 = vdwg.mxu0
    %240 = vmatpush.msra.mxu0 %v141
    %241 = vmatpush.msra.mxu0 %v137
    %242 = vmatpush.msra.mxu0 %v133
    %243 = vmatpush.msra.mxu0 %v129
    %244 = vmatpush.msra.mxu0 %v125
    %245 = vmatpush.msra.mxu0 %v121
    %246 = vmatpush.msra.mxu0 %v117
    %247 = vmatpush.msra.mxu0 %v113
    %248 = vmatpush.msra.mxu0 %v109
    %249 = vmatpush.msra.mxu0 %v105
    %250 = vmatpush.msra.mxu0 %v101
    %251 = vmatpush.msra.mxu0 %v97
    %252 = vmatpush.msra.mxu0 %v93
    %253 = vmatpush.msra.mxu0 %v89
    %254 = vmatpush.msra.mxu0 %v85
    %255 = vmatpush.msra.mxu0 %v81
    %256 = vmatmul.f32.gmra.mxu0 %v210
    %v257 = vpop.f32.mrf.mxu0
    %v258 = vadd.f32 %v213, %v257
    %259 = vdwg.mxu0
    %260 = vmatpush.msra.mxu0 %v142
    %261 = vmatpush.msra.mxu0 %v138
    %262 = vmatpush.msra.mxu0 %v134
    %263 = vmatpush.msra.mxu0 %v130
    %264 = vmatpush.msra.mxu0 %v126
    %265 = vmatpush.msra.mxu0 %v122
    %266 = vmatpush.msra.mxu0 %v118
    %267 = vmatpush.msra.mxu0 %v114
    %268 = vmatpush.msra.mxu0 %v110
    %269 = vmatpush.msra.mxu0 %v106
    %270 = vmatpush.msra.mxu0 %v102
    %271 = vmatpush.msra.mxu0 %v98
    %272 = vmatpush.msra.mxu0 %v94
    %273 = vmatpush.msra.mxu0 %v90
    %274 = vmatpush.msra.mxu0 %v86
    %275 = vmatpush.msra.mxu0 %v82
    %276 = vmatmul.f32.gmra.mxu0 %v210
    %v277 = vpop.f32.mrf.mxu0
    %v278 = vadd.f32 %v214, %v277
    %279 = vdwg.mxu0
    %280 = vmatpush.msra.mxu0 %v143
    %281 = vmatpush.msra.mxu0 %v139
    %282 = vmatpush.msra.mxu0 %v135
    %283 = vmatpush.msra.mxu0 %v131
    %284 = vmatpush.msra.mxu0 %v127
    %285 = vmatpush.msra.mxu0 %v123
    %286 = vmatpush.msra.mxu0 %v119
    %287 = vmatpush.msra.mxu0 %v115
    %288 = vmatpush.msra.mxu0 %v111
    %289 = vmatpush.msra.mxu0 %v107
    %290 = vmatpush.msra.mxu0 %v103
    %291 = vmatpush.msra.mxu0 %v99
    %292 = vmatpush.msra.mxu0 %v95
    %293 = vmatpush.msra.mxu0 %v91
    %294 = vmatpush.msra.mxu0 %v87
    %295 = vmatpush.msra.mxu0 %v83
    %296 = vmatmul.f32.gmra.mxu0 %v210
    %v297 = vpop.f32.mrf.mxu0
    %v298 = vadd.f32 %v215, %v297
    %299 = vdwg.mxu0
    %v300 = vmul.f32 %v238, 0.5
    %v301 = vmul.f32 %v258, 0.5
    %v302 = vmul.f32 %v278, 0.5
    %v303 = vmul.f32 %v298, 0.5
    %v304 = vmul.f32 %v238, %v238
    %v305 = vmul.f32 %v258, %v258
    %v306 = vmul.f32 %v278, %v278
    %v307 = vmul.f32 %v298, %v298
    %v308 = vmul.f32 %v304, %v238
    %v309 = vmul.f32 %v305, %v258
    %v310 = vmul.f32 %v306, %v278
    %v311 = vmul.f32 %v307, %v298
    %v312 = vmul.f32 %v308, 0.044715
    %v313 = vmul.f32 %v309, 0.044715
    %v314 = vmul.f32 %v310, 0.044715
    %v315 = vmul.f32 %v311, 0.044715
    %v316 = vadd.f32 %v238, %v312
    %v317 = vadd.f32 %v258, %v313
    %v318 = vadd.f32 %v278, %v314
    %v319 = vadd.f32 %v298, %v315
    %v320 = vmul.f32 %v316, 0.7978846
    %v321 = vmul.f32 %v317, 0.7978846
    %v322 = vmul.f32 %v318, 0.7978846
    %v323 = vmul.f32 %v319, 0.7978846
    %v324 = vtanh.pop %v320
    %v325 = vtanh.pop %v321
    %v326 = vtanh.pop %v322
    %v327 = vtanh.pop %v323
    %v328 = vadd.f32 %v324, 1.0
    %v329 = vadd.f32 %v325, 1.0
    %v330 = vadd.f32 %v326, 1.0
    %v331 = vadd.f32 %v327, 1.0
    %v332 = vmul.f32 %v300, %v328
    %v333 = vmul.f32 %v301, %v329
    %v334 = vmul.f32 %v302, %v330
    %v335 = vmul.f32 %v303, %v331
    %v337 = vperm.slane %v209, 0
    %339 = vmatpush.msra.mxu0 %v159
    %340 = vmatpush.msra.mxu0 %v158
    %341 = vmatpush.msra.mxu0 %v157
    %342 = vmatpush.msra.mxu0 %v156
    %343 = vmatpush.msra.mxu0 %v155
    %344 = vmatpush.msra.mxu0 %v154
    %345 = vmatpush.msra.mxu0 %v153
    %346 = vmatpush.msra.mxu0 %v152
    %347 = vmatpush.msra.mxu0 %v151
    %348 = vmatpush.msra.mxu0 %v150
    %349 = vmatpush.msra.mxu0 %v149
    %350 = vmatpush.msra.mxu0 %v148
    %351 = vmatpush.msra.mxu0 %v147
    %352 = vmatpush.msra.mxu0 %v146
    %353 = vmatpush.msra.mxu0 %v145
    %354 = vmatpush.msra.mxu0 %v144
    %355 = vmatmul.f32.gmra.mxu0 %v332
    %v356 = vpop.f32.mrf.mxu0
    %v357 = vadd.f32 %v337, %v356
    %358 = vdwg.mxu0
    %359 = vmatpush.msra.mxu0 %v175
    %360 = vmatpush.msra.mxu0 %v174
    %361 = vmatpush.msra.mxu0 %v173
    %362 = vmatpush.msra.mxu0 %v172
    %363 = vmatpush.msra.mxu0 %v171
    %364 = vmatpush.msra.mxu0 %v170
    %365 = vmatpush.msra.mxu0 %v169
    %366 = vmatpush.msra.mxu0 %v168
    %367 = vmatpush.msra.mxu0 %v167
    %368 = vmatpush.msra.mxu0 %v166
    %369 = vmatpush.msra.mxu0 %v165
    %370 = vmatpush.msra.mxu0 %v164
    %371 = vmatpush.msra.mxu0 %v163
    %372 = vmatpush.msra.mxu0 %v162
    %373 = vmatpush.msra.mxu0 %v161
    %374 = vmatpush.msra.mxu0 %v160
    %375 = vmatmul.f32.gmra.mxu0 %v333
    %v376 = vpop.f32.mrf.mxu0
    %v377 = vadd.f32 %v357, %v376
    %378 = vdwg.mxu0
    %379 = vmatpush.msra.mxu0 %v191
    %380 = vmatpush.msra.mxu0 %v190
    %381 = vmatpush.msra.mxu0 %v189
    %382 = vmatpush.msra.mxu0 %v188
    %383 = vmatpush.msra.mxu0 %v187
    %384 = vmatpush.msra.mxu0 %v186
    %385 = vmatpush.msra.mxu0 %v185
    %386 = vmatpush.msra.mxu0 %v184
    %387 = vmatpush.msra.mxu0 %v183
    %388 = vmatpush.msra.mxu0 %v182
    %389 = vmatpush.msra.mxu0 %v181
    %390 = vmatpush.msra.mxu0 %v180
    %391 = vmatpush.msra.mxu0 %v179
    %392 = vmatpush.msra.mxu0 %v178
    %393 = vmatpush.msra.mxu0 %v177
    %394 = vmatpush.msra.mxu0 %v176
    %395 = vmatmul.f32.gmra.mxu0 %v334
    %v396 = vpop.f32.mrf.mxu0
    %v397 = vadd.f32 %v377, %v396
    %398 = vdwg.mxu0
    %399 = vmatpush.msra.mxu0 %v207
    %400 = vmatpush.msra.mxu0 %v206
    %401 = vmatpush.msra.mxu0 %v205
    %402 = vmatpush.msra.mxu0 %v204
    %403 = vmatpush.msra.mxu0 %v203
    %404 = vmatpush.msra.mxu0 %v202
    %405 = vmatpush.msra.mxu0 %v201
    %406 = vmatpush.msra.mxu0 %v200
    %407 = vmatpush.msra.mxu0 %v199
    %408 = vmatpush.msra.mxu0 %v198
    %409 = vmatpush.msra.mxu0 %v197
    %410 = vmatpush.msra.mxu0 %v196
    %411 = vmatpush.msra.mxu0 %v195
    %412 = vmatpush.msra.mxu0 %v194
    %413 = vmatpush.msra.mxu0 %v193
    %414 = vmatpush.msra.mxu0 %v192
    %415 = vmatmul.f32.gmra.mxu0 %v335
    %v416 = vpop.f32.mrf.mxu0
    %v417 = vadd.f32 %v397, %v416
    %418 = vdwg.mxu0
    %419 = vst [vmem:[#allocation10] sm:$0xff] %v417
    // Predicated region
    $region38: #{tpu_custom_call.1} parent=1 // pred_check
      _
    $region39: #{tpu_custom_call.1} parent=1 // pred_check_branch
      %421 = sbr.rel (0) target = $region41
    $region40: #{tpu_custom_call.1} parent=1 // pred_region
      %423 = vsyncadd [#allocation4], 0
      %s425 = sshll.u32 [#allocation10], 4
      %s426 = int_to_ptr.vmem [resolvable:$true] %s425
      %s427 = sshll.u32 %s5, 4
      %s428 = int_to_ptr.hbm [resolvable:$true] %s427
      %430 = dma.vmem_to_hbm [thread:$0]  %s426, 128, %s428, [#allocation4]
    $region41: #{tpu_custom_call.1} parent=1 // pred_fallthru
      _
    // Predicated region
    $region42: #{tpu_custom_call.1} parent=1 // pred_check
      _
    $region43: #{tpu_custom_call.1} parent=1 // pred_check_branch
      %432 = sbr.rel (0) target = $region45
    $region44: #{tpu_custom_call.1} parent=1 // pred_region
      %434 = dma.done [#allocation4], 128
    $region45: #{tpu_custom_call.1} parent=1 // pred_fallthru
      _
    %435 = vsyncpa [#allocation3], 1
    %436 = vsyncpa [#allocation6], 1
    %437 = vsyncpa [#allocation9], 1
    %438 = vsyncpa [#allocation4], 1

</llo_original>
